<compile_context>
chip_gen: v5e
topology: v5e:2x2
jax: 0.10.0
libtpu: 0.0.40
codegen_flags: <defaults>
</compile_context>

<pallas_src>
import jax
import jax.numpy as jnp
import numpy as np
from jax.experimental import pallas as pl
from jax.experimental.pallas import tpu as pltpu


def _soft_pos_add_kernel(emb_ref, x_ref, o_ref):
    # emb_ref : (tr, Ld)     VMEM -- precomputed positional embedding rows
    # x_ref   : (tb, tr, Ld) VMEM -- tb batch elements, same spatial rows
    # o_ref   : (tb, tr, Ld) VMEM (aliases x's HBM buffer)
    emb = emb_ref[...].astype(jnp.float32)
    o_ref[...] = (x_ref[...].astype(jnp.float32) + emb[None]).astype(o_ref.dtype)


def _tpu_budget():
    """Best-effort (vmem_limit_bytes, target_block_bytes, num_tensorcores)."""
    vmem_capacity = 128 << 20          # v5e/v6e default; v7x reports 64 MiB
    num_cores = 1
    try:
        info = pltpu.get_tpu_info()
        vmem_capacity = int(getattr(info, "vmem_capacity_bytes", vmem_capacity))
        for attr in ("num_tensorcores", "tensorcores_per_chip", "num_cores"):
            v = getattr(info, attr, None)
            if isinstance(v, int) and v > 0:
                num_cores = v
                break
    except Exception:
        pass
    try:
        kind = jax.devices()[0].device_kind.lower()
        if "v7" in kind:               # 2 TensorCores per chip
            num_cores = max(num_cores, 2)
    except Exception:
        pass
    vmem_limit = min(vmem_capacity * 3 // 4, 96 << 20)   # 48 MiB on v7x, 96 MiB on v5e/v6e
    target_block = (8 << 20) if vmem_capacity <= (64 << 20) else (16 << 20)
    return vmem_limit, target_block, num_cores


def _choose_tiles(B, H, Ld, itemsize, *, target_block_bytes, max_block_bytes,
                  num_cores):
    """Pick (tb, tr): batch-tile and spatial-row-tile for (B, H, Ld) blocks."""
    row_bytes = Ld * itemsize                      # one spatial row, one batch element

    # Preferred row granularity follows sublane packing (8 rows for 4-byte
    # dtypes, 16 for 2-byte, 32 for 1-byte); 8 is the hard legality floor;
    # if H is not 8-aligned only a full-extent row block is legal.
    packing = max(8, 32 // max(itemsize, 1))
    if H % packing == 0:
        step = packing
    elif H % 8 == 0:
        step = 8
    else:
        step = None

    def pick_tr(tb):
        if step is None:
            return H
        tr = (target_block_bytes // max(tb * row_bytes, 1)) // step * step
        tr = max(step, min(tr, H))
        while H % tr != 0:                         # no ragged row tiles
            tr -= step
        return tr

    # Prefer folding the whole batch into one block; split the batch only when
    # even the minimum legal row tile would blow the VMEM budget.
    min_tr = step if step is not None else H
    tb = 1
    for d in range(B, 0, -1):
        if B % d == 0 and d * min_tr * row_bytes <= max_block_bytes:
            tb = d
            break
    # TODO(synk): if even tb=1 with a full-extent H block exceeds the budget
    # (H not 8-aligned and huge), a lane-axis split would also be needed.

    tr = pick_tr(tb)

    # Megacore (v7x only): keep the step count a multiple of the TC count so
    # both cores stream a balanced share.  Skip on single-TC chips where extra
    # steps are pure per-step overhead.
    if num_cores > 1:
        n_steps = (B // tb) * (H // tr)
        if n_steps % num_cores != 0:
            if (step is not None and tr >= 2 * step
                    and (tr // 2) % step == 0 and H % (tr // 2) == 0):
                tr //= 2
            elif tb % 2 == 0:
                tb //= 2
    return tb, tr


def soft_position_embed(inputs_nhwc, grid_hw4, weight, bias, *,
                        target_block_bytes=None,
                        prefer_xla_fusion_for_tiny=False):
    """inputs_nhwc: (B, H, W, D)
       grid_hw4  : (H, W, 4) float32
       weight    : (D, 4)   (torch nn.Linear(4, D).weight layout)
       bias      : (D,)
    """
    B, H, W, D = inputs_nhwc.shape
    Ld = W * D                                     # lane-dense trailing axis
    x_dtype = inputs_nhwc.dtype
    itemsize = jnp.dtype(x_dtype).itemsize

    vmem_limit, default_target, num_cores = _tpu_budget()
    if target_block_bytes is None:
        target_block_bytes = default_target
    # x and out blocks are double-buffered (4 block-sized buffers) plus the
    # (at most block-sized) double-buffered emb tile; keep ~20% headroom.
    max_block_bytes = max((vmem_limit * 4 // 5) // 6, 8 * Ld * itemsize)
    target_block_bytes = min(target_block_bytes, max_block_bytes)

    # Tiny (H*W, 4) x (4, D) projection precomputed once in f32 (negligible vs
    # the B*H*W*D streaming add); removes grid/weight/bias from the kernel.
    emb_f32 = (grid_hw4.reshape(H * W, 4).astype(jnp.float32)
               @ weight.T.astype(jnp.float32)
               + bias.astype(jnp.float32))
    emb_dtype = jnp.float32 if x_dtype == jnp.float32 else x_dtype
    emb = emb_f32.astype(emb_dtype).reshape(H, Ld)

    if prefer_xla_fusion_for_tiny and B * H * Ld * itemsize <= (1 << 20):
        # At tiny sizes the fixed pallas_call cost dominates; let XLA fuse the
        # broadcast-add into neighbouring ops instead (off by default so the
        # Pallas path is exercised).
        out = inputs_nhwc.astype(jnp.float32) + emb_f32.reshape(1, H, W, D)
        return out.astype(x_dtype)

    x3 = inputs_nhwc.reshape(B, H, Ld)
    tb, tr = _choose_tiles(B, H, Ld, itemsize,
                           target_block_bytes=target_block_bytes,
                           max_block_bytes=max_block_bytes,
                           num_cores=num_cores)
    n_b, n_h = pl.cdiv(B, tb), pl.cdiv(H, tr)

    cost = pl.CostEstimate(
        flops=B * H * Ld,
        transcendentals=0,
        bytes_accessed=2 * B * H * Ld * itemsize
        + n_b * H * Ld * jnp.dtype(emb_dtype).itemsize)

    out3 = pl.pallas_call(
        _soft_pos_add_kernel,
        out_shape=jax.ShapeDtypeStruct((B, H, Ld), x_dtype),
        grid_spec=pltpu.PrefetchScalarGridSpec(
            num_scalar_prefetch=0,
            grid=(n_b, n_h),
            in_specs=[
                pl.BlockSpec((tr, Ld), lambda bi, hi: (hi, 0)),        # emb rows
                pl.BlockSpec((tb, tr, Ld), lambda bi, hi: (bi, hi, 0)),  # x tile
            ],
            out_specs=pl.BlockSpec((tb, tr, Ld), lambda bi, hi: (bi, hi, 0)),
        ),
        input_output_aliases={1: 0},   # out aliases x3 (same shape & dtype)
        compiler_params=pltpu.CompilerParams(
            dimension_semantics=("parallel", "parallel"),
            vmem_limit_bytes=vmem_limit),
        cost_estimate=cost,
    )(emb, x3)

    return out3.reshape(B, H, W, D)


def build_grid(resolution):
    """Same as SoftPositionEmbed.build_grid, returns (H, W, 4) float32."""
    ranges = [np.linspace(0.0, 1.0, num=res) for res in resolution]
    grid = np.meshgrid(*ranges, sparse=False, indexing="ij")
    grid = np.stack(grid, axis=-1).astype(np.float32)       # (H, W, 2)
    grid = np.concatenate([grid, 1.0 - grid], axis=-1)      # (H, W, 4)
    return jnp.asarray(grid)


if __name__ == "__main__":
    B, H, W, D = 2, 16, 16, 32

    key = jax.random.PRNGKey(0)
    k_x, k_w, k_b = jax.random.split(key, 3)

    # Deterministic synthetic parameters (torch Linear(4, D) shapes).
    weight = jax.random.normal(k_w, (D, 4), dtype=jnp.float32) * 0.1
    bias = jax.random.normal(k_b, (D,), dtype=jnp.float32) * 0.1

    # Inputs: NHWC, the layout the module's broadcast implies.
    x = jax.random.normal(k_x, (B, H, W, D), dtype=jnp.float32)

    grid = build_grid((H, W))

    # Pure-JAX reference (the module's forward), computed before the kernel so
    # the input/output-aliased call cannot perturb it.
    ref = x + (grid.reshape(H * W, 4) @ weight.T + bias).reshape(1, H, W, D)
    ref = jax.block_until_ready(ref)

    out = soft_position_embed(x, grid, weight, bias)
    out = jax.block_until_ready(out)

    np.testing.assert_allclose(np.asarray(out), np.asarray(ref),
                               rtol=1e-5, atol=1e-5)

    print("KERNEL_OK")
</pallas_src>

<mosaic_0001>
module attributes {stable_mosaic.version = 11 : i64} {
  func.func @_soft_pos_add_kernel(%arg0: i32, %arg1: i32, %arg2: memref<16x512xf32, #tpu.memory_space<vmem>>, %arg3: memref<2x16x512xf32, #tpu.memory_space<vmem>>, %arg4: memref<2x16x512xf32, #tpu.memory_space<vmem>>) attributes {dimension_semantics = [#tpu.dimension_semantics<parallel>, #tpu.dimension_semantics<parallel>], iteration_bounds = array<i64: 1, 1>, scalar_prefetch = 0 : i64, scratch_operands = 0 : i64, tpu.core_type = #tpu.core_type<tc>, window_params = [{transform_indices = @transform_0, window_bounds = array<i64: 16, 512>}, {transform_indices = @transform_1, window_bounds = array<i64: 2, 16, 512>}, {transform_indices = @transform_2, window_bounds = array<i64: 2, 16, 512>}]} {
    %c0 = arith.constant 0 : index
    %c0_0 = arith.constant 0 : index
    %0 = vector.load %arg2[%c0, %c0_0] : memref<16x512xf32, #tpu.memory_space<vmem>>, vector<16x512xf32>
    %c0_1 = arith.constant 0 : index
    %c0_2 = arith.constant 0 : index
    %c0_3 = arith.constant 0 : index
    %1 = vector.load %arg3[%c0_1, %c0_2, %c0_3] : memref<2x16x512xf32, #tpu.memory_space<vmem>>, vector<2x16x512xf32>
    %2 = vector.shape_cast %0 : vector<16x512xf32> to vector<1x16x512xf32>
    %3 = vector.broadcast %2 : vector<1x16x512xf32> to vector<2x16x512xf32>
    %4 = arith.addf %1, %3 : vector<2x16x512xf32>
    %c0_4 = arith.constant 0 : index
    %c0_5 = arith.constant 0 : index
    %c0_6 = arith.constant 0 : index
    %5 = vector.load %arg4[%c0_4, %c0_5, %c0_6] : memref<2x16x512xf32, #tpu.memory_space<vmem>>, vector<2x16x512xf32>
    tpu.vector_store %arg4[%c0_4, %c0_5, %c0_6], %4 {strides = array<i32>} : memref<2x16x512xf32, #tpu.memory_space<vmem>>, vector<2x16x512xf32>,
    return
  }
  func.func @transform_0(%arg0: i32, %arg1: i32) -> (i32, i32) {
    %c0_i32 = arith.constant 0 : i32
    %c0_i32_0 = arith.constant 0 : i32
    return %arg1, %c0_i32 : i32, i32
  }
  func.func @transform_1(%arg0: i32, %arg1: i32) -> (i32, i32, i32) {
    %c0_i32 = arith.constant 0 : i32
    %c0_i32_0 = arith.constant 0 : i32
    return %arg0, %arg1, %c0_i32 : i32, i32, i32
  }
  func.func @transform_2(%arg0: i32, %arg1: i32) -> (i32, i32, i32) {
    %c0_i32 = arith.constant 0 : i32
    %c0_i32_0 = arith.constant 0 : i32
    return %arg0, %arg1, %c0_i32 : i32, i32, i32
  }
}

</mosaic_0001>

<llo_original>
// kernel: tpu_custom_call.1
$region0: #{tpu_custom_call.1}
  #allocation0 [shape = 'u32[]', space=smem, size = 0x4, offset = 0x4, fixed_abs, tag = 'smem constant byte address 0x4 - core index']
  #allocation1 [shape = 'u32[72,128]{1,0:T(1,128)}', space=vmem, size = 0x9000, scoped, tag = 'internal scratch']
  %s0 = inlined_call_operand.vmem [shape: f32[16,512], index: 0, kind: input, shape index: {}]
  %s1 = inlined_call_operand.hbm [shape: f32[2,16,512], index: 1, kind: input, shape index: {}, may-alias: {1,2}]
  %s2 = inlined_call_operand.hbm [shape: f32[2,16,512], index: 2, kind: output, shape index: {}, may-alias: {1,2}]
  %s3 = sld [smem:[#allocation0]]
  $region22: #{tpu_custom_call.1} parent=0
    _
  %s5 = ssub.s32 1, %s3
  %s6 = scalar_select 0, %s5, %s3
  $region1: #{tpu_custom_call.1} parent=0
    #allocation2 [shape = 'u8[65536]{0}', space=vmem, size = 0x10000, scoped, tag = 'input window, operand 1, single buffered']
    #allocation3 [shape = 's32[1]{0}', space=sflag, size = 0x4, scoped, tag = 'scoped memory for tpu_custom_call.1']
    #allocation4 [shape = 's32[1]{0}', space=sflag, size = 0x4, scoped, tag = 'scoped memory for tpu_custom_call.1']
    #allocation5 [shape = 'u8[65536]{0}', space=vmem, size = 0x10000, scoped, tag = 'output window, operand 0, single buffered']
    %7 = vsyncpa [#allocation3], 0
    %8 = vsyncpa [#allocation4], 0
    // Predicated region
    $region2: #{tpu_custom_call.1} parent=1 // pred_check
      _
    $region3: #{tpu_custom_call.1} parent=1 // pred_check_branch
      %10 = sbr.rel (0) target = $region5
    $region4: #{tpu_custom_call.1} parent=1 // pred_region
      _
    $region5: #{tpu_custom_call.1} parent=1 // pred_fallthru
      _
    // Predicated region
    $region6: #{tpu_custom_call.1} parent=1 // pred_check
      _
    $region7: #{tpu_custom_call.1} parent=1 // pred_check_branch
      %12 = sbr.rel (0) target = $region9
    $region8: #{tpu_custom_call.1} parent=1 // pred_region
      %14 = vsyncadd [#allocation3], 0
      %s15 = sshll.u32 %s1, 4
      %s16 = int_to_ptr.hbm [resolvable:$true] %s15
      %s17 = sshll.u32 [#allocation2], 4
      %s18 = int_to_ptr.vmem [resolvable:$true] %s17
      %23 = dma.hbm_to_vmem [thread:$0]  %s16, 2048, %s18, [#allocation3], 512, 512, 32
    $region9: #{tpu_custom_call.1} parent=1 // pred_fallthru
      _
    // Predicated region
    $region10: #{tpu_custom_call.1} parent=1 // pred_check
      _
    $region11: #{tpu_custom_call.1} parent=1 // pred_check_branch
      %25 = sbr.rel (0) target = $region13
    $region12: #{tpu_custom_call.1} parent=1 // pred_region
      %27 = dma.done [#allocation3], 2048
    $region13: #{tpu_custom_call.1} parent=1 // pred_fallthru
      _
    %v28 = vld [vmem:[%s0] sm:$0xff]
    %v29 = vld [vmem:[%s0 + $0x8] sm:$0xff]
    %v30 = vld [vmem:[%s0 + $0x10] sm:$0xff]
    %v31 = vld [vmem:[%s0 + $0x18] sm:$0xff]
    %v32 = vld [vmem:[%s0 + $0x20] sm:$0xff]
    %v33 = vld [vmem:[%s0 + $0x28] sm:$0xff]
    %v34 = vld [vmem:[%s0 + $0x30] sm:$0xff]
    %v35 = vld [vmem:[%s0 + $0x38] sm:$0xff]
    %v36 = vld [vmem:[#allocation2] sm:$0xff]
    %v37 = vld [vmem:[#allocation2 + $0x8] sm:$0xff]
    %v38 = vld [vmem:[#allocation2 + $0x10] sm:$0xff]
    %v39 = vld [vmem:[#allocation2 + $0x18] sm:$0xff]
    %v40 = vld [vmem:[#allocation2 + $0x20] sm:$0xff]
    %v41 = vld [vmem:[#allocation2 + $0x28] sm:$0xff]
    %v42 = vld [vmem:[#allocation2 + $0x30] sm:$0xff]
    %v43 = vld [vmem:[#allocation2 + $0x38] sm:$0xff]
    %v44 = vld [vmem:[#allocation2 + $0x40] sm:$0xff]
    %v45 = vld [vmem:[#allocation2 + $0x48] sm:$0xff]
    %v46 = vld [vmem:[#allocation2 + $0x50] sm:$0xff]
    %v47 = vld [vmem:[#allocation2 + $0x58] sm:$0xff]
    %v48 = vld [vmem:[#allocation2 + $0x60] sm:$0xff]
    %v49 = vld [vmem:[#allocation2 + $0x68] sm:$0xff]
    %v50 = vld [vmem:[#allocation2 + $0x70] sm:$0xff]
    %v51 = vld [vmem:[#allocation2 + $0x78] sm:$0xff]
    %v52 = vadd.f32 %v36, %v28
    %v53 = vadd.f32 %v37, %v29
    %v54 = vadd.f32 %v38, %v30
    %v55 = vadd.f32 %v39, %v31
    %v56 = vadd.f32 %v40, %v32
    %v57 = vadd.f32 %v41, %v33
    %v58 = vadd.f32 %v42, %v34
    %v59 = vadd.f32 %v43, %v35
    %v60 = vadd.f32 %v44, %v28
    %v61 = vadd.f32 %v45, %v29
    %v62 = vadd.f32 %v46, %v30
    %v63 = vadd.f32 %v47, %v31
    %v64 = vadd.f32 %v48, %v32
    %v65 = vadd.f32 %v49, %v33
    %v66 = vadd.f32 %v50, %v34
    %v67 = vadd.f32 %v51, %v35
    %68 = vst [vmem:[#allocation5] sm:$0xff] %v52
    %69 = vst [vmem:[#allocation5 + $0x8] sm:$0xff] %v53
    %70 = vst [vmem:[#allocation5 + $0x10] sm:$0xff] %v54
    %71 = vst [vmem:[#allocation5 + $0x18] sm:$0xff] %v55
    %72 = vst [vmem:[#allocation5 + $0x20] sm:$0xff] %v56
    %73 = vst [vmem:[#allocation5 + $0x28] sm:$0xff] %v57
    %74 = vst [vmem:[#allocation5 + $0x30] sm:$0xff] %v58
    %75 = vst [vmem:[#allocation5 + $0x38] sm:$0xff] %v59
    %76 = vst [vmem:[#allocation5 + $0x40] sm:$0xff] %v60
    %77 = vst [vmem:[#allocation5 + $0x48] sm:$0xff] %v61
    %78 = vst [vmem:[#allocation5 + $0x50] sm:$0xff] %v62
    %79 = vst [vmem:[#allocation5 + $0x58] sm:$0xff] %v63
    %80 = vst [vmem:[#allocation5 + $0x60] sm:$0xff] %v64
    %81 = vst [vmem:[#allocation5 + $0x68] sm:$0xff] %v65
    %82 = vst [vmem:[#allocation5 + $0x70] sm:$0xff] %v66
    %83 = vst [vmem:[#allocation5 + $0x78] sm:$0xff] %v67
    // Predicated region
    $region14: #{tpu_custom_call.1} parent=1 // pred_check
      _
    $region15: #{tpu_custom_call.1} parent=1 // pred_check_branch
      %85 = sbr.rel (0) target = $region17
    $region16: #{tpu_custom_call.1} parent=1 // pred_region
      %87 = vsyncadd [#allocation4], 0
      %s88 = sshll.u32 [#allocation5], 4
      %s89 = int_to_ptr.vmem [resolvable:$true] %s88
      %s90 = sshll.u32 %s2, 4
      %s91 = int_to_ptr.hbm [resolvable:$true] %s90
      %96 = dma.vmem_to_hbm [thread:$0]  %s89, 2048, %s91, [#allocation4], 512, 512, 32
    $region17: #{tpu_custom_call.1} parent=1 // pred_fallthru
      _
    // Predicated region
    $region18: #{tpu_custom_call.1} parent=1 // pred_check
      _
    $region19: #{tpu_custom_call.1} parent=1 // pred_check_branch
      %98 = sbr.rel (0) target = $region21
    $region20: #{tpu_custom_call.1} parent=1 // pred_region
      %100 = dma.done [#allocation4], 2048
    $region21: #{tpu_custom_call.1} parent=1 // pred_fallthru
      _
    %101 = vsyncpa [#allocation3], 1
    %102 = vsyncpa [#allocation4], 1

</llo_original>
